<compile_context>
chip_gen: v7x
topology: tpu7x:2x2x1
jax: 0.10.0
libtpu: 0.0.40
codegen_flags: <defaults>
</compile_context>

<pallas_src>
import jax
import jax.numpy as jnp
from jax.experimental import pallas as pl
from jax.experimental.pallas import tpu as pltpu


def _conv1x1_hsig_kernel(x_ref, w_ref, b_ref, o_ref):
    # x_ref: (Cin, TM)    w_ref: (Cout, Cin)  [pre-scaled by 1/6]
    # b_ref: (Cout, 1)    [(bias + 3) / 6]    o_ref: (Cout, TM)
    x = x_ref[...]                                  # (Cin, TM)
    w = w_ref[...]                                  # (Cout, Cin)
    cin = x.shape[0]

    # 3-tap VPU MAC: acc[c, m] = b'[c] + sum_k w'[c, k] * x[k, m]
    acc = b_ref[...] + w[:, 0:1] * x[0:1, :]        # (Cout, TM)
    for k in range(1, cin):
        acc = acc + w[:, k:k + 1] * x[k:k + 1, :]

    # hardsigmoid with the /6 already folded into w', b'
    o_ref[...] = jnp.clip(acc, 0.0, 1.0).astype(o_ref.dtype)


def conv1x1_hardsigmoid(x_nchw, weight, bias, *, tm=None):
    """x_nchw: (N, Cin, H, W); weight: (Cout, Cin, 1, 1); bias: (Cout,).

    Returns Conv2d(Cin, Cout, 1, stride=1, padding=1)(x) followed by
    clamp(x + 3, 0, 6) / 6, shape (N, Cout, H + 2, W + 2), float32.
    """
    N, Cin, H, W = x_nchw.shape
    Cout = weight.shape[0]
    Hp, Wp = H + 2, W + 2
    M = Hp * Wp

    # Single layout-prep pass: spatial zero pad.  The kernel then produces the
    # full padded output, so no border embed / output reshuffle is needed.
    x_pad = jnp.pad(x_nchw.astype(jnp.float32), ((0, 0), (0, 0), (1, 1), (1, 1)))
    x_flat = x_pad.reshape(N, Cin, M)               # NCHW consumed natively

    if tm is None:
        cap = 32768  # lanes; (Cin+Cout)*tm*4B*2buf ~= 2.9 MiB -> fits all gens
        if N >= 4 or M <= 512:
            tm = cap
        else:
            # v7x has 2 TensorCores: keep >=4 parallel grid steps when the
            # batch axis alone cannot feed both cores.
            want = max(2, 4 // N)
            tm = min(cap, pl.cdiv(pl.cdiv(M, want), 128) * 128)
        if tm >= M:
            tm = M            # one full-width block (legal: equals array dim)

    m_tiles = pl.cdiv(M, tm)  # ragged trailing tile handled by Pallas masking

    # Fold +3 and the final /6 into the weights / bias (trace-time consts).
    w2d = weight.reshape(Cout, Cin).astype(jnp.float32) * (1.0 / 6.0)
    b2d = ((bias.astype(jnp.float32) + 3.0) * (1.0 / 6.0)).reshape(Cout, 1)

    out_flat = pl.pallas_call(
        _conv1x1_hsig_kernel,
        out_shape=jax.ShapeDtypeStruct((N, Cout, M), jnp.float32),
        grid_spec=pltpu.PrefetchScalarGridSpec(
            num_scalar_prefetch=0,
            grid=(N, m_tiles),
            in_specs=[
                pl.BlockSpec((pl.Squeezed(), Cin, tm), lambda n, i: (n, 0, i)),
                pl.BlockSpec((Cout, Cin), lambda n, i: (0, 0)),
                pl.BlockSpec((Cout, 1), lambda n, i: (0, 0)),
            ],
            out_specs=pl.BlockSpec((pl.Squeezed(), Cout, tm),
                                   lambda n, i: (n, 0, i)),
        ),
        compiler_params=pltpu.CompilerParams(
            dimension_semantics=("parallel", "parallel")),
    )(x_flat, w2d, b2d)

    # Free reshape: (N, Cout, Hp*Wp) -> (N, Cout, Hp, Wp)
    return out_flat.reshape(N, Cout, Hp, Wp)


if __name__ == "__main__":
    key = jax.random.PRNGKey(0)
    kx, kw, kb = jax.random.split(key, 3)

    # Small shapes consistent with the module's forward: (N, 3, H, W)
    N, Cin, H, W = 2, 3, 16, 16
    Cout = 8
    x = jax.random.normal(kx, (N, Cin, H, W), dtype=jnp.float32)
    bound = 1.0 / (Cin ** 0.5)
    weight = jax.random.uniform(kw, (Cout, Cin, 1, 1), jnp.float32, -bound, bound)
    bias = jax.random.uniform(kb, (Cout,), jnp.float32, -bound, bound)

    fn = jax.jit(conv1x1_hardsigmoid)
    out = jax.block_until_ready(fn(x, weight, bias))

    # Reference: conv1x1 with padding=1, then clamp(x + 3, 0, 6) / 6.
    x_ref = jnp.pad(x, ((0, 0), (0, 0), (1, 1), (1, 1)))
    ref = jnp.einsum("nchw,oc->nohw", x_ref, weight.reshape(Cout, Cin))
    ref = ref + bias[None, :, None, None]
    ref = jnp.clip(ref + 3.0, 0.0, 6.0) / 6.0

    assert out.shape == (N, Cout, H + 2, W + 2)
    assert jnp.allclose(out, ref, atol=1e-5, rtol=1e-5)

    print("KERNEL_OK")
</pallas_src>

<mosaic_0001>
module attributes {stable_mosaic.version = 11 : i64} {
  func.func @_conv1x1_hsig_kernel(%arg0: i32, %arg1: i32, %arg2: memref<1x3x324xf32, #tpu.memory_space<vmem>>, %arg3: memref<8x3xf32, #tpu.memory_space<vmem>>, %arg4: memref<8x1xf32, #tpu.memory_space<vmem>>, %arg5: memref<1x8x324xf32, #tpu.memory_space<vmem>>) attributes {dimension_semantics = [#tpu.dimension_semantics<parallel>, #tpu.dimension_semantics<parallel>], iteration_bounds = array<i64: 2, 1>, scalar_prefetch = 0 : i64, scratch_operands = 0 : i64, tpu.core_type = #tpu.core_type<tc>, window_params = [{transform_indices = @transform_0, window_bounds = array<i64: 1, 3, 324>}, {pipeline_mode = #tpu.pipeline_mode<synchronous>, transform_indices = @transform_1, window_bounds = array<i64: 8, 3>}, {pipeline_mode = #tpu.pipeline_mode<synchronous>, transform_indices = @transform_2, window_bounds = array<i64: 8, 1>}, {transform_indices = @transform_3, window_bounds = array<i64: 1, 8, 324>}]} {
    %c0 = arith.constant 0 : index
    %c0_0 = arith.constant 0 : index
    %c0_1 = arith.constant 0 : index
    %0 = vector.load %arg2[%c0, %c0_0, %c0_1] : memref<1x3x324xf32, #tpu.memory_space<vmem>>, vector<1x3x324xf32>
    %1 = vector.shape_cast %0 : vector<1x3x324xf32> to vector<3x324xf32>
    %c0_2 = arith.constant 0 : index
    %c0_3 = arith.constant 0 : index
    %2 = vector.load %arg3[%c0_2, %c0_3] : memref<8x3xf32, #tpu.memory_space<vmem>>, vector<8x3xf32>
    %c0_4 = arith.constant 0 : index
    %c0_5 = arith.constant 0 : index
    %3 = vector.load %arg4[%c0_4, %c0_5] : memref<8x1xf32, #tpu.memory_space<vmem>>, vector<8x1xf32>
    %4 = vector.extract_strided_slice %2 {offsets = [0, 0], sizes = [8, 1], strides = [1, 1]} : vector<8x3xf32> to vector<8x1xf32>
    %5 = vector.extract_strided_slice %1 {offsets = [0, 0], sizes = [1, 324], strides = [1, 1]} : vector<3x324xf32> to vector<1x324xf32>
    %6 = vector.broadcast %4 : vector<8x1xf32> to vector<8x324xf32>
    %7 = vector.broadcast %5 : vector<1x324xf32> to vector<8x324xf32>
    %8 = arith.mulf %6, %7 : vector<8x324xf32>
    %9 = vector.broadcast %3 : vector<8x1xf32> to vector<8x324xf32>
    %10 = arith.addf %9, %8 : vector<8x324xf32>
    %11 = vector.extract_strided_slice %2 {offsets = [0, 1], sizes = [8, 1], strides = [1, 1]} : vector<8x3xf32> to vector<8x1xf32>
    %12 = vector.extract_strided_slice %1 {offsets = [1, 0], sizes = [1, 324], strides = [1, 1]} : vector<3x324xf32> to vector<1x324xf32>
    %13 = vector.broadcast %11 : vector<8x1xf32> to vector<8x324xf32>
    %14 = vector.broadcast %12 : vector<1x324xf32> to vector<8x324xf32>
    %15 = arith.mulf %13, %14 : vector<8x324xf32>
    %16 = arith.addf %10, %15 : vector<8x324xf32>
    %17 = vector.extract_strided_slice %2 {offsets = [0, 2], sizes = [8, 1], strides = [1, 1]} : vector<8x3xf32> to vector<8x1xf32>
    %18 = vector.extract_strided_slice %1 {offsets = [2, 0], sizes = [1, 324], strides = [1, 1]} : vector<3x324xf32> to vector<1x324xf32>
    %19 = vector.broadcast %17 : vector<8x1xf32> to vector<8x324xf32>
    %20 = vector.broadcast %18 : vector<1x324xf32> to vector<8x324xf32>
    %21 = arith.mulf %19, %20 : vector<8x324xf32>
    %22 = arith.addf %16, %21 : vector<8x324xf32>
    %cst = arith.constant 0.000000e+00 : f32
    %cst_6 = arith.constant 1.000000e+00 : f32
    %23 = vector.broadcast %cst : f32 to vector<8x324xf32>
    %24 = arith.maximumf %23, %22 : vector<8x324xf32>
    %25 = vector.broadcast %cst_6 : f32 to vector<8x324xf32>
    %26 = arith.minimumf %25, %24 : vector<8x324xf32>
    %c0_7 = arith.constant 0 : index
    %c0_8 = arith.constant 0 : index
    %c0_9 = arith.constant 0 : index
    %27 = vector.load %arg5[%c0_7, %c0_8, %c0_9] : memref<1x8x324xf32, #tpu.memory_space<vmem>>, vector<1x8x324xf32>
    %28 = vector.shape_cast %27 : vector<1x8x324xf32> to vector<8x324xf32>
    %29 = vector.shape_cast %26 : vector<8x324xf32> to vector<1x8x324xf32>
    tpu.vector_store %arg5[%c0_7, %c0_8, %c0_9], %29 {strides = array<i32>} : memref<1x8x324xf32, #tpu.memory_space<vmem>>, vector<1x8x324xf32>,
    return
  }
  func.func @transform_0(%arg0: i32, %arg1: i32) -> (i32, i32, i32) {
    %c0_i32 = arith.constant 0 : i32
    %c0_i32_0 = arith.constant 0 : i32
    return %arg0, %c0_i32, %arg1 : i32, i32, i32
  }
  func.func @transform_1(%arg0: i32, %arg1: i32) -> (i32, i32) {
    %c0_i32 = arith.constant 0 : i32
    %c0_i32_0 = arith.constant 0 : i32
    %c0_i32_1 = arith.constant 0 : i32
    return %c0_i32, %c0_i32_0 : i32, i32
  }
  func.func @transform_2(%arg0: i32, %arg1: i32) -> (i32, i32) {
    %c0_i32 = arith.constant 0 : i32
    %c0_i32_0 = arith.constant 0 : i32
    %c0_i32_1 = arith.constant 0 : i32
    return %c0_i32, %c0_i32_0 : i32, i32
  }
  func.func @transform_3(%arg0: i32, %arg1: i32) -> (i32, i32, i32) {
    %c0_i32 = arith.constant 0 : i32
    %c0_i32_0 = arith.constant 0 : i32
    return %arg0, %c0_i32, %arg1 : i32, i32, i32
  }
}

</mosaic_0001>

<llo_original>
// kernel: conv1x1_hardsigmoid.1
$region0: #{conv1x1_hardsigmoid.1}
  #allocation0 [shape = 'u32[]', space=smem, size = 0x4, offset = 0x4, fixed_abs, tag = 'smem constant byte address 0x4 - core index']
  #allocation1 [shape = 'u32[144,128]{1,0:T(1,128)}', space=vmem, size = 0x12000, scoped, tag = 'internal scratch']
  %s0 = inlined_call_operand.vmem [shape: f32[2,3,324], index: 0, kind: input, shape index: {}]
  %s1 = inlined_call_operand.vmem [shape: f32[8,3], index: 1, kind: input, shape index: {}]
  %s2 = inlined_call_operand.vmem [shape: f32[8,1], index: 2, kind: input, shape index: {}]
  %s3 = inlined_call_operand.vmem [shape: f32[2,8,324], index: 3, kind: output, shape index: {}]
  %s4 = sld [smem:[#allocation0]]
  $region45: #{conv1x1_hardsigmoid.1} parent=0
    _
  %s6 = ssub.s32 1, %s4
  %s7 = scalar_select 0, %s6, %s4
  loop: start=0, step=1, limit=4
  $region2: #{conv1x1_hardsigmoid.1} parent=0 // loop_pre_header
    _
  $region3: #{conv1x1_hardsigmoid.1} parent=0 // loop_header
    %s9 = sphi 0, %s13
    %p10 = scmp.ge.s32.totalorder %s9, 4
    %s16 = sphi 0, %s28
    %s17 = sphi 0, %s24
    %s18 = sphi 0, %s16
    %s19 = sphi 0, %s17
    %s20 = sphi 0, %s18
    %s21 = sphi 0, %s19
    %s33 = sphi 0, %s35
    %s36 = sphi 0, %s33
    %s37 = sphi 0, %s36
    %s53 = sphi 0, %s37
    %s57 = sphi 0, %s57
    %s59 = sphi 0, %s57
    %s60 = sphi 0, %s59
    %s74 = sphi 0, %s60
    %s78 = sphi 0, %s78
    %s80 = sphi 0, %s78
    %s81 = sphi 0, %s80
    %s95 = sphi 0, %s81
    %s103 = sphi 0, %s105
    %s106 = sphi 0, %s103
    %s107 = sphi 0, %s106
    %s123 = sphi 0, %s107
  $region4: #{conv1x1_hardsigmoid.1} parent=0 // loop_header_branch
    %12 = sbr.rel (%p10) target = $region8
  $region5: #{conv1x1_hardsigmoid.1} parent=0 // loop_body
    %s14 = ssub.s32 %s9, 1
    %s15 = ssub.s32 %s9, 2
    %s22 = sadd.s32 1, %s17
    %p23 = scmp.ge.s32.totalorder %s22, 1
    %s24 = scalar_select %p23, 0, %s22
    %s25 = sadd.s32 1, %s16
    %s26 = scalar_select %p23, %s25, %s16
    %p27 = scmp.ge.s32.totalorder %s26, 2
    %s28 = scalar_select %p27, 0, %s26
    %s29 = ssub.s32 %s16, %s28
    %s30 = ssub.s32 %s17, %s24
    %s31 = sor.u32 %s29, %s30
    %p32 = scmp.eq.s32.totalorder %s31, 0
    %s34 = sadd.s32 %s33, 1
    %s35 = scalar_select %p32, %s33, %s34
    %p38 = pneg %p32
    %p39 = scmp.eq.s32.totalorder %s9, 1
    %p40 = por %p38, %p39
    %p41 = scmp.ne.s32.totalorder %s33, %s36
    %p42 = scmp.eq.s32.totalorder %s9, 0
    %p43 = por %p41, %p42
    %p44 = scmp.ne.s32.totalorder %s33, %s36
    %p45 = scmp.eq.s32.totalorder %s14, 1
    %p46 = por %p44, %p45
    %p47 = scmp.ne.s32.totalorder %s36, %s37
    %p48 = scmp.eq.s32.totalorder %s14, 0
    %p49 = por %p47, %p48
    %p50 = scmp.ne.s32.totalorder %s36, %s37
    %p51 = scmp.eq.s32.totalorder %s15, 1
    %p52 = por %p50, %p51
    %p54 = scmp.ne.s32.totalorder %s37, %s53
    %p55 = scmp.eq.s32.totalorder %s15, 0
    %p56 = por %p54, %p55
    %s58 = sadd.s32 %s57, 1
    %p61 = scmp.eq.s32.totalorder %s9, 1
    %p62 = scmp.ne.s32.totalorder %s57, %s59
    %p63 = scmp.eq.s32.totalorder %s9, 0
    %p64 = por %p62, %p63
    %p65 = scmp.ne.s32.totalorder %s57, %s59
    %p66 = scmp.eq.s32.totalorder %s14, 1
    %p67 = por %p65, %p66
    %p68 = scmp.ne.s32.totalorder %s59, %s60
    %p69 = scmp.eq.s32.totalorder %s14, 0
    %p70 = por %p68, %p69
    %p71 = scmp.ne.s32.totalorder %s59, %s60
    %p72 = scmp.eq.s32.totalorder %s15, 1
    %p73 = por %p71, %p72
    %p75 = scmp.ne.s32.totalorder %s60, %s74
    %p76 = scmp.eq.s32.totalorder %s15, 0
    %p77 = por %p75, %p76
    %s79 = sadd.s32 %s78, 1
    %p82 = scmp.eq.s32.totalorder %s9, 1
    %p83 = scmp.ne.s32.totalorder %s78, %s80
    %p84 = scmp.eq.s32.totalorder %s9, 0
    %p85 = por %p83, %p84
    %p86 = scmp.ne.s32.totalorder %s78, %s80
    %p87 = scmp.eq.s32.totalorder %s14, 1
    %p88 = por %p86, %p87
    %p89 = scmp.ne.s32.totalorder %s80, %s81
    %p90 = scmp.eq.s32.totalorder %s14, 0
    %p91 = por %p89, %p90
    %p92 = scmp.ne.s32.totalorder %s80, %s81
    %p93 = scmp.eq.s32.totalorder %s15, 1
    %p94 = por %p92, %p93
    %p96 = scmp.ne.s32.totalorder %s81, %s95
    %p97 = scmp.eq.s32.totalorder %s15, 0
    %p98 = por %p96, %p97
    %s99 = ssub.s32 %s16, %s28
    %s100 = ssub.s32 %s17, %s24
    %s101 = sor.u32 %s99, %s100
    %p102 = scmp.eq.s32.totalorder %s101, 0
    %s104 = sadd.s32 %s103, 1
    %s105 = scalar_select %p102, %s103, %s104
    %p108 = pneg %p102
    %p109 = scmp.eq.s32.totalorder %s9, 1
    %p110 = por %p108, %p109
    %p111 = scmp.ne.s32.totalorder %s103, %s106
    %p112 = scmp.eq.s32.totalorder %s9, 0
    %p113 = por %p111, %p112
    %p114 = scmp.ne.s32.totalorder %s103, %s106
    %p115 = scmp.eq.s32.totalorder %s14, 1
    %p116 = por %p114, %p115
    %p117 = scmp.ne.s32.totalorder %s106, %s107
    %p118 = scmp.eq.s32.totalorder %s14, 0
    %p119 = por %p117, %p118
    %p120 = scmp.ne.s32.totalorder %s106, %s107
    %p121 = scmp.eq.s32.totalorder %s15, 1
    %p122 = por %p120, %p121
    %p124 = scmp.ne.s32.totalorder %s107, %s123
    %p125 = scmp.eq.s32.totalorder %s15, 0
    %p126 = por %p124, %p125
    %p127 = scmp.le.s32.totalorder 1, %s9
    %p128 = scmp.lt.s32.totalorder %s9, 3
    %p129 = pnand %p127, %p128
    %p130 = pneg %p129
    // Predicated region
    $region9: #{conv1x1_hardsigmoid.1} parent=5 // pred_check
      _
    $region10: #{conv1x1_hardsigmoid.1} parent=5 // pred_check_branch
      %132 = sbr.rel (%p129) target = $region12
    $region11: #{conv1x1_hardsigmoid.1} parent=5 // pred_region
      %s133 = ssub.s32 %s9, 1
      // Predicated region
      $region13: #{conv1x1_hardsigmoid.1} parent=11 // pred_check
        %p134 = pneg %p70
      $region14: #{conv1x1_hardsigmoid.1} parent=11 // pred_check_branch
        %136 = sbr.rel (%p134) target = $region16
      $region15: #{conv1x1_hardsigmoid.1} parent=11 // pred_region
        _
      $region16: #{conv1x1_hardsigmoid.1} parent=11 // pred_fallthru
        _
      // Predicated region
      $region17: #{conv1x1_hardsigmoid.1} parent=11 // pred_check
        %p137 = pneg %p91
      $region18: #{conv1x1_hardsigmoid.1} parent=11 // pred_check_branch
        %139 = sbr.rel (%p137) target = $region20
      $region19: #{conv1x1_hardsigmoid.1} parent=11 // pred_region
        _
      $region20: #{conv1x1_hardsigmoid.1} parent=11 // pred_fallthru
        _
    $region12: #{conv1x1_hardsigmoid.1} parent=5 // pred_fallthru
      _
    %p140 = scmp.lt.s32.totalorder %s9, 2
    // Predicated region
    $region21: #{conv1x1_hardsigmoid.1} parent=5 // pred_check
      %p141 = pneg %p140
    $region22: #{conv1x1_hardsigmoid.1} parent=5 // pred_check_branch
      %143 = sbr.rel (%p141) target = $region24
    $region23: #{conv1x1_hardsigmoid.1} parent=5 // pred_region
      // Predicated region
      $region25: #{conv1x1_hardsigmoid.1} parent=23 // pred_check
        %p144 = pneg %p43
      $region26: #{conv1x1_hardsigmoid.1} parent=23 // pred_check_branch
        %146 = sbr.rel (%p144) target = $region28
      $region27: #{conv1x1_hardsigmoid.1} parent=23 // pred_region
        %s147 = smul.u32 3, %s17
        %p148 = scmp.lt.s32.totalorder %s16, 1
        %s149 = scalar_select %p148, %s16, 1
        %p150 = scmp.lt.s32.totalorder %s147, 2
        %s151 = scalar_select %p150, %s147, 2
        %s152 = smul.addr %s149, 3
        %s153 = sadd.s32 %s151, %s152
        %s154 = smul.addr %s153, 4
        %s155 = scalar_lea.vmem %s0, %s154
        %s156 = smul.u32 3, %s17
      $region28: #{conv1x1_hardsigmoid.1} parent=23 // pred_fallthru
        _
    $region24: #{conv1x1_hardsigmoid.1} parent=5 // pred_fallthru
      _
    %p157 = scmp.le.s32.totalorder 1, %s9
    %p158 = scmp.lt.s32.totalorder %s9, 3
    %p159 = pnand %p157, %p158
    %p160 = pneg %p159
    // Predicated region
    $region29: #{conv1x1_hardsigmoid.1} parent=5 // pred_check
      _
    $region30: #{conv1x1_hardsigmoid.1} parent=5 // pred_check_branch
      %162 = sbr.rel (%p159) target = $region32
    $region31: #{conv1x1_hardsigmoid.1} parent=5 // pred_region
      %s163 = ssub.s32 %s9, 1
      %s164 = smul.u32 3, %s19
      %p165 = scmp.lt.s32.totalorder %s18, 1
      %s166 = scalar_select %p165, %s18, 1
      %p167 = scmp.lt.s32.totalorder %s164, 2
      %s168 = scalar_select %p167, %s164, 2
      %s169 = smul.addr %s166, 3
      %s170 = sadd.s32 %s168, %s169
      %s171 = smul.addr %s170, 4
      %s172 = scalar_lea.vmem %s0, %s171
      %p173 = pneg %p49
      %p174 = pneg %p46
      %p175 = pneg %p70
      %p176 = pneg %p67
      %p177 = pneg %p91
      %p178 = pneg %p88
      %p179 = pneg %p119
      %p180 = pneg %p116
      %s181 = smul.u32 3, %s19
      %p182 = scmp.lt.s32.totalorder %s18, 1
      %s183 = scalar_select %p182, %s18, 1
      %p184 = scmp.lt.s32.totalorder %s181, 2
      %s185 = scalar_select %p184, %s181, 2
      %s186 = smul.addr %s183, 3
      %s187 = sadd.s32 %s185, %s186
      %s188 = smul.addr %s187, 8
      %s189 = scalar_lea.vmem %s3, %s188
      %s190 = smul.u32 3, %s19
      %p191 = scmp.lt.s32.totalorder %s18, 1
      %s192 = scalar_select %p191, %s18, 1
      %p193 = scmp.lt.s32.totalorder %s190, 2
      %s194 = scalar_select %p193, %s190, 2
      %s195 = smul.addr %s192, 3
      %s196 = sadd.s32 %s194, %s195
      %s197 = smul.addr %s196, 4
      %s198 = scalar_lea.vmem %s0, %s197
      %s199 = smul.u32 3, %s19
      %s200 = smul.u32 3, %s19
      %p201 = scmp.lt.s32.totalorder %s18, 1
      %s202 = scalar_select %p201, %s18, 1
      %p203 = scmp.lt.s32.totalorder %s200, 2
      %s204 = scalar_select %p203, %s200, 2
      %s205 = smul.addr %s202, 3
      %s206 = sadd.s32 %s204, %s205
      %s207 = smul.addr %s206, 8
      %s208 = scalar_lea.vmem %s3, %s207
      %s209 = smul.u32 3, %s19
      %v210 = vld [vmem:[%s198] sm:$0x77]
      %v211 = vld [vmem:[%s198 + $0x8] sm:$0x7]
      %v212 = vld [vmem:[%s1] sm:$0xff]
      %v213 = vld [vmem:[%s2] sm:$0xff]
      %215 = vset.pattern.permute.xlu0 0
      %216 = vperm.xlu0 %215, %v212
      %v217 = vpop.permute.xlu0 %216
      %v221 = vlaneseq
      %v222 = vshrl.u32 %v221, 7
      %v223 = vsub.s32 0, %v222
      %v224 = vrot.slane %v210, %v223
      %v225 = vlaneseq
      %v226 = vshrl.u32 %v225, 7
      %v227 = vsub.s32 4, %v226
      %v228 = vrot.slane %v210, %v227
      %v229 = vlaneseq
      %v230 = vshrl.u32 %v229, 7
      %v231 = vsub.s32 0, %v230
      %v232 = vrot.slane %v211, %v231
      %v236 = vlaneseq
      %v237 = vshrl.u32 %v236, 7
      %v238 = vsub.s32 0, %v237
      %v239 = vrot.slane %v224, %v238
      %v240 = vlaneseq
      %v241 = vshrl.u32 %v240, 7
      %v242 = vsub.s32 0, %v241
      %v243 = vrot.slane %v228, %v242
      %v244 = vlaneseq
      %v245 = vshrl.u32 %v244, 7
      %v246 = vsub.s32 0, %v245
      %v247 = vrot.slane %v232, %v246
      %v248 = vmul.f32 %v217, %v239
      %v249 = vmul.f32 %v217, %v243
      %v250 = vmul.f32 %v217, %v247
      %252 = vset.pattern.permute.xlu0 0
      %253 = vperm.xlu0 %252, %v213
      %v254 = vpop.permute.xlu0 %253
      %v256 = vadd.f32 %v254, %v248
      %v257 = vadd.f32 %v254, %v249
      %v258 = vadd.f32 %v254, %v250
      %259 = vset.pattern.permute.xlu0 1
      %260 = vperm.xlu0 %259, %v212
      %v261 = vpop.permute.xlu0 %260
      %v263 = vlaneseq
      %v264 = vshrl.u32 %v263, 7
      %v265 = vsub.s32 1, %v264
      %v266 = vrot.slane %v210, %v265
      %v267 = vlaneseq
      %v268 = vshrl.u32 %v267, 7
      %v269 = vsub.s32 5, %v268
      %v270 = vrot.slane %v210, %v269
      %v271 = vlaneseq
      %v272 = vshrl.u32 %v271, 7
      %v273 = vsub.s32 1, %v272
      %v274 = vrot.slane %v211, %v273
      %v278 = vlaneseq
      %v279 = vshrl.u32 %v278, 7
      %v280 = vsub.s32 1, %v279
      %v281 = vrot.slane %v266, %v280
      %v282 = vlaneseq
      %v283 = vshrl.u32 %v282, 7
      %v284 = vsub.s32 1, %v283
      %v285 = vrot.slane %v270, %v284
      %v286 = vlaneseq
      %v287 = vshrl.u32 %v286, 7
      %v288 = vsub.s32 1, %v287
      %v289 = vrot.slane %v274, %v288
      %v290 = vmul.f32 %v261, %v281
      %v291 = vmul.f32 %v261, %v285
      %v292 = vmul.f32 %v261, %v289
      %v293 = vadd.f32 %v256, %v290
      %v294 = vadd.f32 %v257, %v291
      %v295 = vadd.f32 %v258, %v292
      %296 = vset.pattern.permute.xlu0 2
      %297 = vperm.xlu0 %296, %v212
      %v298 = vpop.permute.xlu0 %297
      %v300 = vlaneseq
      %v301 = vshrl.u32 %v300, 7
      %v302 = vsub.s32 2, %v301
      %v303 = vrot.slane %v210, %v302
      %v304 = vlaneseq
      %v305 = vshrl.u32 %v304, 7
      %v306 = vsub.s32 6, %v305
      %v307 = vrot.slane %v210, %v306
      %v308 = vlaneseq
      %v309 = vshrl.u32 %v308, 7
      %v310 = vsub.s32 2, %v309
      %v311 = vrot.slane %v211, %v310
      %v315 = vlaneseq
      %v316 = vshrl.u32 %v315, 7
      %v317 = vsub.s32 2, %v316
      %v318 = vrot.slane %v303, %v317
      %v319 = vlaneseq
      %v320 = vshrl.u32 %v319, 7
      %v321 = vsub.s32 2, %v320
      %v322 = vrot.slane %v307, %v321
      %v323 = vlaneseq
      %v324 = vshrl.u32 %v323, 7
      %v325 = vsub.s32 2, %v324
      %v326 = vrot.slane %v311, %v325
      %v327 = vmul.f32 %v298, %v318
      %v328 = vmul.f32 %v298, %v322
      %v329 = vmul.f32 %v298, %v326
      %v330 = vadd.f32 %v293, %v327
      %v331 = vadd.f32 %v294, %v328
      %v332 = vadd.f32 %v295, %v329
      %v333 = vmax.f32 %v330, 0.0
      %v334 = vmax.f32 %v331, 0.0
      %v335 = vmax.f32 %v332, 0.0
      %v336 = vmin.f32 %v333, 1.0
      %v337 = vmin.f32 %v334, 1.0
      %v338 = vmin.f32 %v335, 1.0
      %339 = vst [vmem:[%s208] sm:$0xff] %v336
      %340 = vst [vmem:[%s208 + $0x8] sm:$0xff] %v337
      %vm341 = vcmask 556032
      %342 = vst.msk [vmem:[%s208 + $0x10] sm:$0xff] %vm341, %v338
      %s343 = smul.u32 3, %s19
      %p344 = scmp.lt.s32.totalorder %s18, 1
      %s345 = scalar_select %p344, %s18, 1
      %p346 = scmp.lt.s32.totalorder %s343, 2
      %s347 = scalar_select %p346, %s343, 2
      %s348 = smul.addr %s345, 3
      %s349 = sadd.s32 %s347, %s348
      %s350 = smul.addr %s349, 8
      %s351 = scalar_lea.vmem %s3, %s350
      // Predicated region
      $region33: #{conv1x1_hardsigmoid.1} parent=31 // pred_check
        %p352 = pneg %p116
      $region34: #{conv1x1_hardsigmoid.1} parent=31 // pred_check_branch
        %354 = sbr.rel (%p352) target = $region36
      $region35: #{conv1x1_hardsigmoid.1} parent=31 // pred_region
        %s355 = smul.u32 3, %s19
      $region36: #{conv1x1_hardsigmoid.1} parent=31 // pred_fallthru
        _
    $region32: #{conv1x1_hardsigmoid.1} parent=5 // pred_fallthru
      _
    %p356 = scmp.le.s32.totalorder 2, %s9
    // Predicated region
    $region37: #{conv1x1_hardsigmoid.1} parent=5 // pred_check
      %p357 = pneg %p356
    $region38: #{conv1x1_hardsigmoid.1} parent=5 // pred_check_branch
      %359 = sbr.rel (%p357) target = $region40
    $region39: #{conv1x1_hardsigmoid.1} parent=5 // pred_region
      %s360 = ssub.s32 %s9, 2
      // Predicated region
      $region41: #{conv1x1_hardsigmoid.1} parent=39 // pred_check
        %p361 = pneg %p122
      $region42: #{conv1x1_hardsigmoid.1} parent=39 // pred_check_branch
        %363 = sbr.rel (%p361) target = $region44
      $region43: #{conv1x1_hardsigmoid.1} parent=39 // pred_region
        %s364 = smul.u32 3, %s21
        %p365 = scmp.lt.s32.totalorder %s20, 1
        %s366 = scalar_select %p365, %s20, 1
        %p367 = scmp.lt.s32.totalorder %s364, 2
        %s368 = scalar_select %p367, %s364, 2
        %s369 = smul.addr %s366, 3
        %s370 = sadd.s32 %s368, %s369
        %s371 = smul.addr %s370, 8
        %s372 = scalar_lea.vmem %s3, %s371
      $region44: #{conv1x1_hardsigmoid.1} parent=39 // pred_fallthru
        _
    $region40: #{conv1x1_hardsigmoid.1} parent=5 // pred_fallthru
      _
  $region6: #{conv1x1_hardsigmoid.1} parent=0 // loop_footer
    %s13 = sadd.s32 1, %s9
  $region7: #{conv1x1_hardsigmoid.1} parent=0 // loop_footer_branch
    %8 = sbr.rel target = $region3
  $region8: #{conv1x1_hardsigmoid.1} parent=0 // loop_exit
    _

</llo_original>
